<compile_context>
chip_gen: v5e
topology: v5e:2x2
jax: 0.10.0
libtpu: 0.0.40
codegen_flags: <defaults>
</compile_context>

<pallas_src>
import jax
import jax.numpy as jnp
from jax.experimental import pallas as pl
from jax.experimental.pallas import tpu as pltpu

_EPS = 1e-6  # torch.nn.PairwiseDistance default eps (added to the difference)


def _sare_loss_kernel(q_ref, p_ref, n_ref, gtp_ref, gtn_ref, out_ref):
    q = q_ref[...].astype(jnp.float32)
    p = p_ref[...].astype(jnp.float32)
    n = n_ref[...].astype(jnp.float32)

    diff_ap = q - p + _EPS
    diff_an = q - n + _EPS
    # Squared pairwise distances; sqrt dropped since only D^2 is consumed.
    sq_ap = jnp.sum(diff_ap * diff_ap, axis=-1, keepdims=True)  # (tb, 1)
    sq_an = jnp.sum(diff_an * diff_an, axis=-1, keepdims=True)  # (tb, 1)

    gt_ap = gtp_ref[...]  # (tb, 1) f32
    gt_an = gtn_ref[...]  # (tb, 1) f32

    qp = sq_ap * (1.5 - gt_ap)
    qn = sq_an * (0.5 + gt_an)

    # Literal torch formula: log(1 + exp(x)).  Overflows to +inf for x >~ 88,
    # matching the reference module's behavior.
    out_ref[...] = jnp.log(1.0 + jnp.exp(qp - qn)).astype(out_ref.dtype)


def _vmem_capacity_bytes():
    """Physical VMEM per TensorCore (64 MiB v7x, 128 MiB v5e/v6e)."""
    try:
        return int(pltpu.get_tpu_info().vmem_capacity_bytes)
    except Exception:
        return 64 * 1024 * 1024  # conservative (v7x) fallback


def _choose_block_rows(B, D, in_itemsize, vmem_cap):
    """Largest batch tile whose full per-step working set fits the VMEM budget.

    Working set per grid step (conservative upper bound):
      * double-buffered HBM-dtype input tiles : 3 inputs * 2 bufs * tb*D*itemsize
      * f32 widened copies of q/p/n           : 3 * tb*D*4
      * f32 diff_ap / diff_an temporaries     : 2 * tb*D*4
    (column operands/outputs are negligible.)
    """
    bytes_per_row = D * (3 * 2 * in_itemsize + (3 + 2) * 4)
    budget = int(0.70 * vmem_cap)  # ~45 MiB on v7x, ~90 MiB on v5e/v6e
    tb = budget // max(bytes_per_row, 1)
    tb = max(8, (tb // 8) * 8)     # sublane (8) alignment
    if tb >= B:
        return B                   # single tile == full extent
    return tb


def sare_loss(q, p, n, gt_anchor_positive, gt_anchor_negative, block_rows=None):
    """q/p/n: (B, D); gt_*: (B,). Returns (B,) float32 loss (SARELoss.forward)."""
    B, D = q.shape
    gt_ap = gt_anchor_positive.reshape(B, 1).astype(jnp.float32)
    gt_an = gt_anchor_negative.reshape(B, 1).astype(jnp.float32)

    in_itemsize = jnp.dtype(q.dtype).itemsize
    vmem_cap = _vmem_capacity_bytes()
    tb = (block_rows if block_rows is not None
          else _choose_block_rows(B, D, in_itemsize, vmem_cap))
    grid = (pl.cdiv(B, tb),)

    emb_spec = pl.BlockSpec((tb, D), lambda i: (i, 0))
    col_spec = pl.BlockSpec((tb, 1), lambda i: (i, 0))

    # Advisory cost: dominated by the 3*B*D input stream; tiny transcendental
    # and flop counts make the memory-bound nature explicit to the scheduler.
    cost = pl.CostEstimate(
        flops=int(8 * B * D + 8 * B),
        transcendentals=int(2 * B),
        bytes_accessed=int(3 * B * D * in_itemsize + 2 * B * 4 + B * 4),
    )

    # Raise the scoped-VMEM limit past the per-generation defaults (16 MiB on
    # v5e, 32 MiB on v6e/v7x) so the large tiles chosen above actually compile.
    vmem_limit = min(int(0.90 * vmem_cap), 128 * 1024 * 1024)

    out = pl.pallas_call(
        _sare_loss_kernel,
        out_shape=jax.ShapeDtypeStruct((B, 1), jnp.float32),
        grid=grid,
        in_specs=[emb_spec, emb_spec, emb_spec, col_spec, col_spec],
        out_specs=col_spec,
        compiler_params=pltpu.CompilerParams(
            dimension_semantics=("parallel",),
            vmem_limit_bytes=vmem_limit,
        ),
        cost_estimate=cost,
    )(q, p, n, gt_ap, gt_an)

    # torch: (B,) after .squeeze(); drop the kept singleton dim.
    return out[:, 0]


def _reference(q, p, n, gt_ap, gt_an):
    qf = q.astype(jnp.float32)
    pf = p.astype(jnp.float32)
    nf = n.astype(jnp.float32)
    d_ap = jnp.sqrt(jnp.sum((qf - pf + _EPS) ** 2, axis=-1))
    d_an = jnp.sqrt(jnp.sum((qf - nf + _EPS) ** 2, axis=-1))
    qp = d_ap ** 2 * (1.5 - gt_ap.astype(jnp.float32))
    qn = d_an ** 2 * (0.5 + gt_an.astype(jnp.float32))
    return jnp.log(1.0 + jnp.exp(qp - qn))


if __name__ == "__main__":
    key = jax.random.PRNGKey(0)

    # Test 1: small shapes, single tile.
    k1, k2, k3, k4, k5, key = jax.random.split(key, 6)
    B, D = 8, 32
    q = jax.random.normal(k1, (B, D), dtype=jnp.float32)
    p = jax.random.normal(k2, (B, D), dtype=jnp.float32)
    n = jax.random.normal(k3, (B, D), dtype=jnp.float32)
    gt_ap = jax.random.bernoulli(k4, 0.5, (B,)).astype(jnp.float32)
    gt_an = jax.random.bernoulli(k5, 0.5, (B,)).astype(jnp.float32)

    loss = jax.block_until_ready(sare_loss(q, p, n, gt_ap, gt_an))
    ref = _reference(q, p, n, gt_ap, gt_an)
    assert loss.shape == (B,)
    assert jnp.allclose(loss, ref, atol=1e-5, rtol=1e-5), (loss, ref)

    # Test 2: multi-tile grid with a partial last block (pipelined path).
    k1, k2, k3, k4, k5, key = jax.random.split(key, 6)
    B2, D2 = 40, 128
    q2 = jax.random.normal(k1, (B2, D2), dtype=jnp.float32)
    p2 = jax.random.normal(k2, (B2, D2), dtype=jnp.float32)
    n2 = jax.random.normal(k3, (B2, D2), dtype=jnp.float32)
    gt_ap2 = jax.random.bernoulli(k4, 0.5, (B2,)).astype(jnp.float32)
    gt_an2 = jax.random.bernoulli(k5, 0.5, (B2,)).astype(jnp.float32)

    loss2 = jax.block_until_ready(
        sare_loss(q2, p2, n2, gt_ap2, gt_an2, block_rows=16))
    ref2 = _reference(q2, p2, n2, gt_ap2, gt_an2)
    assert loss2.shape == (B2,)
    assert jnp.allclose(loss2, ref2, atol=1e-5, rtol=1e-5), (loss2, ref2)

    # Test 3: bf16 inputs exercise the in-kernel f32 widening path.
    k1, k2, k3, k4, k5, key = jax.random.split(key, 6)
    B3, D3 = 32, 64
    q3 = jax.random.normal(k1, (B3, D3), dtype=jnp.bfloat16)
    p3 = jax.random.normal(k2, (B3, D3), dtype=jnp.bfloat16)
    n3 = jax.random.normal(k3, (B3, D3), dtype=jnp.bfloat16)
    gt_ap3 = jax.random.bernoulli(k4, 0.5, (B3,)).astype(jnp.float32)
    gt_an3 = jax.random.bernoulli(k5, 0.5, (B3,)).astype(jnp.float32)

    loss3 = jax.block_until_ready(sare_loss(q3, p3, n3, gt_ap3, gt_an3))
    ref3 = _reference(q3, p3, n3, gt_ap3, gt_an3)
    assert loss3.shape == (B3,)
    assert jnp.allclose(loss3, ref3, atol=1e-3, rtol=1e-3), (loss3, ref3)

    print("KERNEL_OK")
</pallas_src>

<mosaic_0001>
module attributes {stable_mosaic.version = 11 : i64} {
  func.func @_sare_loss_kernel(%arg0: i32, %arg1: memref<8x32xf32, #tpu.memory_space<vmem>>, %arg2: memref<8x32xf32, #tpu.memory_space<vmem>>, %arg3: memref<8x32xf32, #tpu.memory_space<vmem>>, %arg4: memref<8x1xf32, #tpu.memory_space<vmem>>, %arg5: memref<8x1xf32, #tpu.memory_space<vmem>>, %arg6: memref<8x1xf32, #tpu.memory_space<vmem>>) attributes {dimension_semantics = [#tpu.dimension_semantics<parallel>], iteration_bounds = array<i64: 1>, scalar_prefetch = 0 : i64, scratch_operands = 0 : i64, tpu.core_type = #tpu.core_type<tc>, window_params = [{transform_indices = @transform_0, window_bounds = array<i64: 8, 32>}, {transform_indices = @transform_1, window_bounds = array<i64: 8, 32>}, {transform_indices = @transform_2, window_bounds = array<i64: 8, 32>}, {transform_indices = @transform_3, window_bounds = array<i64: 8, 1>}, {transform_indices = @transform_4, window_bounds = array<i64: 8, 1>}, {transform_indices = @transform_5, window_bounds = array<i64: 8, 1>}]} {
    %c0 = arith.constant 0 : index
    %c0_0 = arith.constant 0 : index
    %0 = vector.load %arg1[%c0, %c0_0] : memref<8x32xf32, #tpu.memory_space<vmem>>, vector<8x32xf32>
    %c0_1 = arith.constant 0 : index
    %c0_2 = arith.constant 0 : index
    %1 = vector.load %arg2[%c0_1, %c0_2] : memref<8x32xf32, #tpu.memory_space<vmem>>, vector<8x32xf32>
    %c0_3 = arith.constant 0 : index
    %c0_4 = arith.constant 0 : index
    %2 = vector.load %arg3[%c0_3, %c0_4] : memref<8x32xf32, #tpu.memory_space<vmem>>, vector<8x32xf32>
    %3 = arith.subf %0, %1 : vector<8x32xf32>
    %cst = arith.constant 9.99999997E-7 : f32
    %4 = vector.broadcast %cst : f32 to vector<8x32xf32>
    %5 = arith.addf %3, %4 : vector<8x32xf32>
    %6 = arith.subf %0, %2 : vector<8x32xf32>
    %cst_5 = arith.constant 9.99999997E-7 : f32
    %7 = vector.broadcast %cst_5 : f32 to vector<8x32xf32>
    %8 = arith.addf %6, %7 : vector<8x32xf32>
    %9 = arith.mulf %5, %5 : vector<8x32xf32>
    %cst_6 = arith.constant dense<0.000000e+00> : vector<8xf32>
    %10 = vector.multi_reduction <add>, %9, %cst_6 [1] : vector<8x32xf32> to vector<8xf32>
    %11 = vector.shape_cast %10 : vector<8xf32> to vector<8x1xf32>
    %12 = arith.mulf %8, %8 : vector<8x32xf32>
    %cst_7 = arith.constant dense<0.000000e+00> : vector<8xf32>
    %13 = vector.multi_reduction <add>, %12, %cst_7 [1] : vector<8x32xf32> to vector<8xf32>
    %14 = vector.shape_cast %13 : vector<8xf32> to vector<8x1xf32>
    %c0_8 = arith.constant 0 : index
    %c0_9 = arith.constant 0 : index
    %15 = vector.load %arg4[%c0_8, %c0_9] : memref<8x1xf32, #tpu.memory_space<vmem>>, vector<8x1xf32>
    %c0_10 = arith.constant 0 : index
    %c0_11 = arith.constant 0 : index
    %16 = vector.load %arg5[%c0_10, %c0_11] : memref<8x1xf32, #tpu.memory_space<vmem>>, vector<8x1xf32>
    %cst_12 = arith.constant 1.500000e+00 : f32
    %17 = vector.broadcast %cst_12 : f32 to vector<8x1xf32>
    %18 = arith.subf %17, %15 : vector<8x1xf32>
    %19 = arith.mulf %11, %18 : vector<8x1xf32>
    %cst_13 = arith.constant 5.000000e-01 : f32
    %20 = vector.broadcast %cst_13 : f32 to vector<8x1xf32>
    %21 = arith.addf %20, %16 : vector<8x1xf32>
    %22 = arith.mulf %14, %21 : vector<8x1xf32>
    %23 = arith.subf %19, %22 : vector<8x1xf32>
    %24 = math.exp %23 : vector<8x1xf32>
    %cst_14 = arith.constant 1.000000e+00 : f32
    %25 = vector.broadcast %cst_14 : f32 to vector<8x1xf32>
    %26 = arith.addf %25, %24 : vector<8x1xf32>
    %27 = math.log %26 : vector<8x1xf32>
    %c0_15 = arith.constant 0 : index
    %c0_16 = arith.constant 0 : index
    %28 = vector.load %arg6[%c0_15, %c0_16] : memref<8x1xf32, #tpu.memory_space<vmem>>, vector<8x1xf32>
    tpu.vector_store %arg6[%c0_15, %c0_16], %27 {strides = array<i32>} : memref<8x1xf32, #tpu.memory_space<vmem>>, vector<8x1xf32>,
    return
  }
  func.func @transform_0(%arg0: i32) -> (i32, i32) {
    %c0_i32 = arith.constant 0 : i32
    %c0_i32_0 = arith.constant 0 : i32
    return %arg0, %c0_i32 : i32, i32
  }
  func.func @transform_1(%arg0: i32) -> (i32, i32) {
    %c0_i32 = arith.constant 0 : i32
    %c0_i32_0 = arith.constant 0 : i32
    return %arg0, %c0_i32 : i32, i32
  }
  func.func @transform_2(%arg0: i32) -> (i32, i32) {
    %c0_i32 = arith.constant 0 : i32
    %c0_i32_0 = arith.constant 0 : i32
    return %arg0, %c0_i32 : i32, i32
  }
  func.func @transform_3(%arg0: i32) -> (i32, i32) {
    %c0_i32 = arith.constant 0 : i32
    %c0_i32_0 = arith.constant 0 : i32
    return %arg0, %c0_i32 : i32, i32
  }
  func.func @transform_4(%arg0: i32) -> (i32, i32) {
    %c0_i32 = arith.constant 0 : i32
    %c0_i32_0 = arith.constant 0 : i32
    return %arg0, %c0_i32 : i32, i32
  }
  func.func @transform_5(%arg0: i32) -> (i32, i32) {
    %c0_i32 = arith.constant 0 : i32
    %c0_i32_0 = arith.constant 0 : i32
    return %arg0, %c0_i32 : i32, i32
  }
}

</mosaic_0001>

<llo_original>
// kernel: tpu_custom_call.1
$region0: #{tpu_custom_call.1}
  #allocation0 [shape = 'u32[]', space=smem, size = 0x4, offset = 0x4, fixed_abs, tag = 'smem constant byte address 0x4 - core index']
  #allocation1 [shape = 'u32[72,128]{1,0:T(1,128)}', space=vmem, size = 0x9000, scoped, tag = 'internal scratch']
  %s0 = inlined_call_operand.vmem [shape: f32[8,32], index: 0, kind: input, shape index: {}]
  %s1 = inlined_call_operand.vmem [shape: f32[8,32], index: 1, kind: input, shape index: {}]
  %s2 = inlined_call_operand.hbm [shape: f32[8,32], index: 2, kind: input, shape index: {}]
  %s3 = inlined_call_operand.vmem [shape: f32[8,1], index: 3, kind: input, shape index: {}]
  %s4 = inlined_call_operand.vmem [shape: f32[8,1], index: 4, kind: input, shape index: {}]
  %s5 = inlined_call_operand.vmem [shape: f32[8,1], index: 5, kind: output, shape index: {}]
  %s6 = sld [smem:[#allocation0]]
  $region34: #{tpu_custom_call.1} parent=0
    _
  %s8 = ssub.s32 1, %s6
  %s9 = scalar_select 0, %s8, %s6
  $region1: #{tpu_custom_call.1} parent=0
    #allocation2 [shape = 'u8[4096]{0}', space=vmem, size = 0x1000, scoped, tag = 'input window, operand 2, single buffered']
    #allocation3 [shape = 's32[1]{0}', space=sflag, size = 0x4, scoped, tag = 'scoped memory for tpu_custom_call.1']
    %10 = vsyncpa [#allocation3], 0
    // Predicated region
    $region2: #{tpu_custom_call.1} parent=1 // pred_check
      _
    $region3: #{tpu_custom_call.1} parent=1 // pred_check_branch
      %12 = sbr.rel (0) target = $region5
    $region4: #{tpu_custom_call.1} parent=1 // pred_region
      _
    $region5: #{tpu_custom_call.1} parent=1 // pred_fallthru
      _
    // Predicated region
    $region6: #{tpu_custom_call.1} parent=1 // pred_check
      _
    $region7: #{tpu_custom_call.1} parent=1 // pred_check_branch
      %14 = sbr.rel (0) target = $region9
    $region8: #{tpu_custom_call.1} parent=1 // pred_region
      _
    $region9: #{tpu_custom_call.1} parent=1 // pred_fallthru
      _
    // Predicated region
    $region10: #{tpu_custom_call.1} parent=1 // pred_check
      _
    $region11: #{tpu_custom_call.1} parent=1 // pred_check_branch
      %16 = sbr.rel (0) target = $region13
    $region12: #{tpu_custom_call.1} parent=1 // pred_region
      %18 = vsyncadd [#allocation3], 0
      %s20 = sshll.u32 %s2, 4
      %s21 = int_to_ptr.hbm [resolvable:$true] %s20
      %s22 = sshll.u32 [#allocation2], 4
      %s23 = int_to_ptr.vmem [resolvable:$true] %s22
      %25 = dma.hbm_to_vmem [thread:$0]  %s21, 128, %s23, [#allocation3]
    $region13: #{tpu_custom_call.1} parent=1 // pred_fallthru
      _
    // Predicated region
    $region14: #{tpu_custom_call.1} parent=1 // pred_check
      _
    $region15: #{tpu_custom_call.1} parent=1 // pred_check_branch
      %27 = sbr.rel (0) target = $region17
    $region16: #{tpu_custom_call.1} parent=1 // pred_region
      _
    $region17: #{tpu_custom_call.1} parent=1 // pred_fallthru
      _
    // Predicated region
    $region18: #{tpu_custom_call.1} parent=1 // pred_check
      _
    $region19: #{tpu_custom_call.1} parent=1 // pred_check_branch
      %29 = sbr.rel (0) target = $region21
    $region20: #{tpu_custom_call.1} parent=1 // pred_region
      _
    $region21: #{tpu_custom_call.1} parent=1 // pred_fallthru
      _
    // Predicated region
    $region22: #{tpu_custom_call.1} parent=1 // pred_check
      _
    $region23: #{tpu_custom_call.1} parent=1 // pred_check_branch
      %31 = sbr.rel (0) target = $region25
    $region24: #{tpu_custom_call.1} parent=1 // pred_region
      %33 = dma.done [#allocation3], 128
    $region25: #{tpu_custom_call.1} parent=1 // pred_fallthru
      _
    %v34 = vld [vmem:[%s0] sm:$0xff]
    %v35 = vld [vmem:[%s1] sm:$0xff]
    %v36 = vld [vmem:[#allocation2] sm:$0xff]
    %v37 = vsub.f32 %v34, %v35
    %v38 = vadd.f32 %v37, 1e-06
    %v39 = vsub.f32 %v34, %v36
    %v40 = vadd.f32 %v39, 1e-06
    %v41 = vmul.f32 %v38, %v38
    %vm42 = vcmask 261120
    %v43 = vsel %vm42, %v41, 0.0
    %44 = vadd.xlane.f32.xlu0 %v43
    %v45 = vpop.xlane.xlu0 %44
    %v46 = vmul.f32 %v40, %v40
    %v47 = vsel %vm42, %v46, 0.0
    %48 = vadd.xlane.f32.xlu0 %v47
    %v49 = vpop.xlane.xlu0 %48
    %v50 = vld [vmem:[%s3] sm:$0xff]
    %v51 = vld [vmem:[%s4] sm:$0xff]
    %v52 = vsub.f32 1.5, %v50
    %v53 = vmul.f32 %v45, %v52
    %v54 = vadd.f32 %v51, 0.5
    %v55 = vmul.f32 %v49, %v54
    %v56 = vsub.f32 %v53, %v55
    %v57 = vmul.f32 %v56, 1.442695
    %v58 = vpow.pop %v57
    %v59 = vadd.f32 %v58, 1.0
    %v60 = vlog2.pop %v59
    %v61 = vmul.f32 %v60, 0.6931472
    %vm62 = vcmask 7168
    %63 = vst.msk [vmem:[%s5] sm:$0xff] %vm62, %v61
    // Predicated region
    $region26: #{tpu_custom_call.1} parent=1 // pred_check
      _
    $region27: #{tpu_custom_call.1} parent=1 // pred_check_branch
      %65 = sbr.rel (0) target = $region29
    $region28: #{tpu_custom_call.1} parent=1 // pred_region
      _
    $region29: #{tpu_custom_call.1} parent=1 // pred_fallthru
      _
    // Predicated region
    $region30: #{tpu_custom_call.1} parent=1 // pred_check
      _
    $region31: #{tpu_custom_call.1} parent=1 // pred_check_branch
      %67 = sbr.rel (0) target = $region33
    $region32: #{tpu_custom_call.1} parent=1 // pred_region
      _
    $region33: #{tpu_custom_call.1} parent=1 // pred_fallthru
      _
    %68 = vsyncpa [#allocation3], 1

</llo_original>
